<compile_context>
chip_gen: v7x
topology: tpu7x:2x2x1
jax: 0.10.0
libtpu: 0.0.40
codegen_flags: <defaults>
</compile_context>

<pallas_src>
import functools
import math

import jax
import jax.numpy as jnp
import numpy as np
from jax import lax
from jax.experimental import pallas as pl
from jax.experimental.pallas import tpu as pltpu


def _l2_normalize_kernel(x_ref, o_ref):
    """Row-wise L2 normalize: x / max(||x||, 1e-8)  (== F.normalize(eps=1e-8))."""
    x = x_ref[...].astype(jnp.float32)
    ssq = jnp.sum(x * x, axis=-1, keepdims=True)
    o_ref[...] = x * lax.rsqrt(jnp.maximum(ssq, 1e-16))


def _supcon_kernel(*refs, inv_temp, n_valid, has_mask):
    """One (row_block i, col_block j) step of the streaming SupCon reduction."""
    if has_mask:
        rf_ref, cf_ref, mask_ref, out_ref, z_acc, s_acc, m_acc = refs
    else:
        rf_ref, cf_ref, rlab_ref, clab_ref, out_ref, z_acc, s_acc, m_acc = refs

    i = pl.program_id(0)
    j = pl.program_id(1)

    @pl.when(j == 0)
    def _init():
        z_acc[...] = jnp.zeros_like(z_acc)
        s_acc[...] = jnp.zeros_like(s_acc)
        m_acc[...] = jnp.zeros_like(m_acc)

    rf = rf_ref[...]                       # (tm, D) f32, already L2-normalized
    cf = cf_ref[...]                       # (tn, D) f32, already L2-normalized
    tm, tn = rf.shape[0], cf.shape[0]

    # MXU matmul contracting the feature dim of both operands: (tm,D)x(tn,D)->(tm,tn)
    sim = lax.dot_general(rf, cf, (((1,), (1,)), ((), ())),
                          preferred_element_type=jnp.float32)
    sim = jnp.clip(sim * inv_temp, -20.0, 20.0)

    # Tile-local (tm, tn) masks only - never N x N.
    grow = i * tm + lax.broadcasted_iota(jnp.int32, (tm, tn), 0)
    gcol = j * tn + lax.broadcasted_iota(jnp.int32, (tm, tn), 1)
    valid = jnp.logical_and(grow != gcol, gcol < n_valid)  # logits_mask & padding
    valid_f = valid.astype(jnp.float32)

    if has_mask:
        pos_f = mask_ref[...].astype(jnp.float32) * valid_f
    else:
        pos = rlab_ref[...] == clab_ref[...]                # (tm,1)==(1,tn)->(tm,tn)
        pos_f = jnp.logical_and(pos, valid).astype(jnp.float32)

    z_acc[...] += jnp.sum(jnp.exp(sim) * valid_f, axis=1, keepdims=True)
    s_acc[...] += jnp.sum(sim * pos_f, axis=1, keepdims=True)
    m_acc[...] += jnp.sum(pos_f, axis=1, keepdims=True)

    @pl.when(j == pl.num_programs(1) - 1)
    def _finalize():
        z = z_acc[...]
        s = s_acc[...]
        m = m_acc[...]
        out_ref[...] = (s - m * jnp.log(z + 1e-8)) * pl.reciprocal(
            m + 1e-8, approx=False)


def _round_up(x, m):
    return ((x + m - 1) // m) * m


def supcon_loss(features, labels=None, mask=None, *, temperature=0.07,
                contrast_mode="all", base_temperature=0.07,
                block_rows=None, block_cols=None):
    """Pallas TPU implementation of SupConLoss.forward (contrast_mode='all').

    features: [B, V, D] (extra trailing dims are flattened, as in the module).
    labels:   optional [B] integer class labels.
    mask:     optional [B, B] positive-pair mask (mutually exclusive w/ labels).
    """
    features = jnp.asarray(features)
    if features.ndim < 3:
        raise ValueError("`features` needs to be of shape [batch_size, n_views, ...]")
    if features.ndim > 3:
        features = features.reshape(features.shape[0], features.shape[1], -1)
    if contrast_mode != "all":
        # TODO(synk): contrast_mode='one' not implemented (the reference module's
        # own logits_mask construction is shape-inconsistent for it when n_views>1).
        raise NotImplementedError("only contrast_mode='all' is implemented")
    if labels is not None and mask is not None:
        raise ValueError("Cannot specify both `labels` and `mask`")

    B, V, D = features.shape
    N = B * V

    # Batch-major flattening (row p = b*V + v) is a free reshape; the loss is
    # invariant to the anchor ordering, so no view-major transpose copy is made.
    contrast = features.reshape(N, D)

    # ---- tile selection ------------------------------------------------------
    if block_rows is None or block_cols is None:
        if N <= 512:
            tm = tn = N                       # single tile, no padding needed
        else:
            tm, tn = 256, 512                 # fits v7x's 32 MiB scoped VMEM easily
    else:
        tm, tn = int(block_rows), int(block_cols)

    n_pad = N if (N % tm == 0 and N % tn == 0) else _round_up(N, math.lcm(tm, tn))
    if tm != n_pad and tm % 8 != 0:
        raise ValueError("block_rows must be a multiple of 8 when tiling")
    if tn != n_pad and tn % 128 != 0:
        raise ValueError("block_cols must be a multiple of 128 when tiling")

    if n_pad > N:
        contrast = jnp.pad(contrast, ((0, n_pad - N), (0, 0)))

    # ---- pass 1: L2-normalize the contrast features once ----------------------
    norm_feat = pl.pallas_call(
        _l2_normalize_kernel,
        out_shape=jax.ShapeDtypeStruct((n_pad, D), jnp.float32),
        grid=(n_pad // tm,),
        in_specs=[pl.BlockSpec((tm, D), lambda i: (i, 0))],
        out_specs=pl.BlockSpec((tm, D), lambda i: (i, 0)),
        compiler_params=pltpu.CompilerParams(
            dimension_semantics=("parallel",)),
    )(contrast)

    # ---- pass 2: streaming Z/S/M reduction over column tiles -------------------
    grid = (n_pad // tm, n_pad // tn)
    in_specs = [
        pl.BlockSpec((tm, D), lambda i, j: (i, 0)),         # anchor row tile
        pl.BlockSpec((tn, D), lambda i, j: (j, 0)),         # contrast column tile
    ]

    if mask is None:
        if labels is None:
            lab = jnp.arange(B, dtype=jnp.int32)            # eye(B) positives
        else:
            lab = jnp.asarray(labels).reshape(-1).astype(jnp.int32)
            if lab.shape[0] != B:
                raise ValueError("Num of labels does not match num of features")
        lab_n = jnp.repeat(lab, V)                          # per-row labels (batch-major)
        if n_pad > N:
            lab_n = jnp.pad(lab_n, (0, n_pad - N), constant_values=-1)
        extra_args = (lab_n.reshape(n_pad, 1), lab_n.reshape(1, n_pad))
        in_specs += [
            pl.BlockSpec((tm, 1), lambda i, j: (i, 0)),     # row labels
            pl.BlockSpec((1, tn), lambda i, j: (0, j)),     # column labels
        ]
        has_mask = False
    else:
        base = jnp.asarray(mask, dtype=jnp.float32)
        if base.shape != (B, B):
            raise ValueError("`mask` must have shape [batch_size, batch_size]")
        # mask.repeat(V, V), expanded in batch-major order; streamed by (tm, tn) tiles.
        # TODO(synk): binary masks could be shipped as int8 to cut this DMA 4x.
        mask_exp = jnp.repeat(jnp.repeat(base, V, axis=0), V, axis=1)
        if n_pad > N:
            mask_exp = jnp.pad(mask_exp, ((0, n_pad - N), (0, n_pad - N)))
        extra_args = (mask_exp,)
        in_specs += [pl.BlockSpec((tm, tn), lambda i, j: (i, j))]
        has_mask = True

    kernel = functools.partial(
        _supcon_kernel, inv_temp=float(1.0 / temperature), n_valid=N,
        has_mask=has_mask)

    mean_log_prob_pos = pl.pallas_call(
        kernel,
        out_shape=jax.ShapeDtypeStruct((n_pad, 1), jnp.float32),
        grid=grid,
        in_specs=in_specs,
        out_specs=pl.BlockSpec((tm, 1), lambda i, j: (i, 0)),
        scratch_shapes=[pltpu.VMEM((tm, 1), jnp.float32)] * 3,
        compiler_params=pltpu.CompilerParams(
            dimension_semantics=("parallel", "arbitrary"),
            vmem_limit_bytes=64 * 1024 * 1024),
    )(norm_feat, norm_feat, *extra_args)

    # Final scale and mean over the N real anchors (trivial O(N) JAX op).
    return -(temperature / base_temperature) * jnp.mean(mean_log_prob_pos[:N, 0])


def _reference_supcon(features, labels=None, mask=None, temperature=0.07,
                      base_temperature=0.07):
    """Pure-JAX mirror of the PyTorch SupConLoss.forward (contrast_mode='all')."""
    B, V, D = features.shape
    feats = features / jnp.maximum(
        jnp.sqrt(jnp.sum(features.astype(jnp.float32) ** 2, axis=2, keepdims=True)),
        1e-8)
    if labels is None and mask is None:
        base = jnp.eye(B, dtype=jnp.float32)
    elif labels is not None:
        lab = labels.reshape(-1, 1)
        base = (lab == lab.T).astype(jnp.float32)
    else:
        base = mask.astype(jnp.float32)
    contrast = jnp.transpose(feats, (1, 0, 2)).reshape(V * B, D)   # view-major
    sim = jnp.matmul(contrast, contrast.T, precision=lax.Precision.HIGHEST)
    sim = jnp.clip(sim / temperature, -20.0, 20.0)
    m = jnp.tile(base, (V, V))
    logits_mask = 1.0 - jnp.eye(V * B, dtype=jnp.float32)
    m = m * logits_mask
    exp_sim = jnp.exp(sim) * logits_mask
    log_prob = sim - jnp.log(exp_sim.sum(1, keepdims=True) + 1e-8)
    mlpp = (m * log_prob).sum(1) / (m.sum(1) + 1e-8)
    return jnp.mean(-(temperature / base_temperature) * mlpp)


if __name__ == "__main__":
    key = jax.random.PRNGKey(0)
    kf, kf2, kl2 = jax.random.split(key, 3)

    # Small demo shapes: batch=4, n_views=2, feature_dim=32.
    B, V, D = 4, 2, 32
    features = jax.random.normal(kf, (B, V, D), dtype=jnp.float32)
    labels = jnp.array([0, 1, 0, 1], dtype=jnp.int32)

    loss = jax.block_until_ready(supcon_loss(features, labels=labels))
    ref = _reference_supcon(features, labels=labels)
    np.testing.assert_allclose(np.asarray(loss), np.asarray(ref),
                               rtol=1e-4, atol=1e-4)

    # Default path: labels=None, mask=None -> eye(B) positives.
    loss_eye = jax.block_until_ready(supcon_loss(features))
    ref_eye = _reference_supcon(features)
    np.testing.assert_allclose(np.asarray(loss_eye), np.asarray(ref_eye),
                               rtol=1e-4, atol=1e-4)

    # Explicit-mask path (same positives as the labels above).
    msk = (labels.reshape(-1, 1) == labels.reshape(1, -1)).astype(jnp.float32)
    loss_m = jax.block_until_ready(supcon_loss(features, mask=msk))
    np.testing.assert_allclose(np.asarray(loss_m), np.asarray(ref),
                               rtol=1e-4, atol=1e-4)

    # Exercise the multi-tile / padded path (2x2 grid, 64 padded rows & columns).
    B2, V2, D2 = 96, 2, 64
    feats2 = jax.random.normal(kf2, (B2, V2, D2), dtype=jnp.float32)
    labels2 = jax.random.randint(kl2, (B2,), 0, 10, dtype=jnp.int32)
    loss2 = jax.block_until_ready(
        supcon_loss(feats2, labels=labels2, block_rows=128, block_cols=128))
    ref2 = _reference_supcon(feats2, labels=labels2)
    np.testing.assert_allclose(np.asarray(loss2), np.asarray(ref2),
                               rtol=1e-4, atol=1e-4)

    print("KERNEL_OK")
</pallas_src>

<mosaic_0001>
module attributes {stable_mosaic.version = 11 : i64} {
  func.func @_l2_normalize_kernel(%arg0: i32, %arg1: memref<8x32xf32, #tpu.memory_space<vmem>>, %arg2: memref<8x32xf32, #tpu.memory_space<vmem>>) attributes {dimension_semantics = [#tpu.dimension_semantics<parallel>], iteration_bounds = array<i64: 1>, scalar_prefetch = 0 : i64, scratch_operands = 0 : i64, tpu.core_type = #tpu.core_type<tc>, window_params = [{transform_indices = @transform_0, window_bounds = array<i64: 8, 32>}, {transform_indices = @transform_1, window_bounds = array<i64: 8, 32>}]} {
    %c0 = arith.constant 0 : index
    %c0_0 = arith.constant 0 : index
    %0 = vector.load %arg1[%c0, %c0_0] : memref<8x32xf32, #tpu.memory_space<vmem>>, vector<8x32xf32>
    %1 = arith.mulf %0, %0 : vector<8x32xf32>
    %cst = arith.constant dense<0.000000e+00> : vector<8xf32>
    %2 = vector.multi_reduction <add>, %1, %cst [1] : vector<8x32xf32> to vector<8xf32>
    %3 = vector.shape_cast %2 : vector<8xf32> to vector<8x1xf32>
    %cst_1 = arith.constant 1.000000e-16 : f32
    %4 = vector.broadcast %cst_1 : f32 to vector<8x1xf32>
    %5 = arith.maximumf %3, %4 : vector<8x1xf32>
    %6 = math.rsqrt %5 : vector<8x1xf32>
    %7 = vector.broadcast %6 : vector<8x1xf32> to vector<8x32xf32>
    %8 = arith.mulf %0, %7 : vector<8x32xf32>
    %c0_2 = arith.constant 0 : index
    %c0_3 = arith.constant 0 : index
    %9 = vector.load %arg2[%c0_2, %c0_3] : memref<8x32xf32, #tpu.memory_space<vmem>>, vector<8x32xf32>
    tpu.vector_store %arg2[%c0_2, %c0_3], %8 {strides = array<i32>} : memref<8x32xf32, #tpu.memory_space<vmem>>, vector<8x32xf32>,
    return
  }
  func.func @transform_0(%arg0: i32) -> (i32, i32) {
    %c0_i32 = arith.constant 0 : i32
    %c0_i32_0 = arith.constant 0 : i32
    return %arg0, %c0_i32 : i32, i32
  }
  func.func @transform_1(%arg0: i32) -> (i32, i32) {
    %c0_i32 = arith.constant 0 : i32
    %c0_i32_0 = arith.constant 0 : i32
    return %arg0, %c0_i32 : i32, i32
  }
}

</mosaic_0001>

<llo_original>
// kernel: tpu_custom_call.1
$region0: #{tpu_custom_call.1}
  #allocation0 [shape = 'u32[]', space=smem, size = 0x4, offset = 0x4, fixed_abs, tag = 'smem constant byte address 0x4 - core index']
  #allocation1 [shape = 'u32[144,128]{1,0:T(1,128)}', space=vmem, size = 0x12000, scoped, tag = 'internal scratch']
  %s0 = inlined_call_operand.hbm [shape: f32[8,32], index: 0, kind: input, shape index: {}]
  %s1 = inlined_call_operand.hbm [shape: f32[8,32], index: 1, kind: output, shape index: {}]
  %s2 = sld [smem:[#allocation0]]
  $region18: #{tpu_custom_call.1} parent=0
    _
  %s4 = ssub.s32 1, %s2
  %s5 = scalar_select 0, %s4, %s2
  $region1: #{tpu_custom_call.1} parent=0
    #allocation2 [shape = 'u8[4096]{0}', space=vmem, size = 0x1000, scoped, tag = 'input window, operand 0, single buffered']
    #allocation3 [shape = 's32[1]{0}', space=sflag, size = 0x4, scoped, tag = 'scoped memory for tpu_custom_call.1']
    #allocation4 [shape = 's32[1]{0}', space=sflag, size = 0x4, scoped, tag = 'scoped memory for tpu_custom_call.1']
    #allocation5 [shape = 'u8[4096]{0}', space=vmem, size = 0x1000, scoped, tag = 'output window, operand 0, single buffered']
    %6 = vsyncpa [#allocation3], 0
    %7 = vsyncpa [#allocation4], 0
    // Predicated region
    $region2: #{tpu_custom_call.1} parent=1 // pred_check
      _
    $region3: #{tpu_custom_call.1} parent=1 // pred_check_branch
      %9 = sbr.rel (0) target = $region5
    $region4: #{tpu_custom_call.1} parent=1 // pred_region
      %s11 = ssub.s32 128, 128
      %12 = vsyncadd [#allocation3], %s11
      %s14 = sshll.u32 [#allocation2], 4
      %s15 = int_to_ptr.vmem [resolvable:$true] %s14
      %17 = dma.hbm_to_vmem [thread:$0]  %s0, 128, %s15, [#allocation3]
    $region5: #{tpu_custom_call.1} parent=1 // pred_fallthru
      _
    // Predicated region
    $region6: #{tpu_custom_call.1} parent=1 // pred_check
      _
    $region7: #{tpu_custom_call.1} parent=1 // pred_check_branch
      %19 = sbr.rel (0) target = $region9
    $region8: #{tpu_custom_call.1} parent=1 // pred_region
      %20 = dma.done [#allocation3], 128
    $region9: #{tpu_custom_call.1} parent=1 // pred_fallthru
      _
    %v21 = vld [vmem:[#allocation2] sm:$0xff]
    %v22 = vmul.f32 %v21, %v21
    %vm23 = vcmask 261120
    %v24 = vsel %vm23, %v22, 0.0
    %25 = vadd.xlane.f32.xlu0 %v24
    %v26 = vpop.xlane.xlu0 %25
    %v27 = vmax.f32 %v26, 1e-16
    %v28 = vrsqrt.pop %v27
    %v29 = vmul.f32 %v21, %v28
    %30 = vst.msk [vmem:[#allocation5] sm:$0xff] %vm23, %v29
    // Predicated region
    $region10: #{tpu_custom_call.1} parent=1 // pred_check
      _
    $region11: #{tpu_custom_call.1} parent=1 // pred_check_branch
      %32 = sbr.rel (0) target = $region13
    $region12: #{tpu_custom_call.1} parent=1 // pred_region
      %s34 = ssub.s32 128, 128
      %35 = vsyncadd [#allocation4], %s34
      %s37 = sshll.u32 [#allocation5], 4
      %s38 = int_to_ptr.vmem [resolvable:$true] %s37
      %40 = dma.vmem_to_hbm [thread:$0]  %s38, 128, %s1, [#allocation4]
    $region13: #{tpu_custom_call.1} parent=1 // pred_fallthru
      _
    // Predicated region
    $region14: #{tpu_custom_call.1} parent=1 // pred_check
      _
    $region15: #{tpu_custom_call.1} parent=1 // pred_check_branch
      %42 = sbr.rel (0) target = $region17
    $region16: #{tpu_custom_call.1} parent=1 // pred_region
      %43 = dma.done [#allocation4], 128
    $region17: #{tpu_custom_call.1} parent=1 // pred_fallthru
      _
    %44 = vsyncpa [#allocation3], 1
    %45 = vsyncpa [#allocation4], 1

</llo_original>
